<compile_context>
chip_gen: v7x
topology: tpu7x:2x2x1
jax: 0.10.0
libtpu: 0.0.40
codegen_flags: <defaults>
</compile_context>

<pallas_src>
import jax
import jax.numpy as jnp
from jax.experimental import pallas as pl
from jax.experimental.pallas import tpu as pltpu


def _round_up(x, m):
    return ((x + m - 1) // m) * m


def _vmem_capacity_bytes():
    """Physical VMEM capacity of the current TPU generation (conservative fallback)."""
    try:
        cap = getattr(pltpu.get_tpu_info(), "vmem_capacity_bytes", None)
    except Exception:
        cap = None
    return int(cap) if cap else (64 << 20)   # fallback = v7x (smallest: 64 MiB)


def _step_bytes(bt, s, h, itemsize):
    """Live VMEM footprint of one grid step."""
    tiles = 2 * bt * (s * s + s * h) * itemsize   # double-buffered mask + hidden tiles
    weight = 2 * h * h * itemsize                 # resident weight (double buffer)
    out = 2 * bt * h * 4                          # double-buffered f32 output block
    interm = 2 * bt * s * h * 4                   # f32 accumulator + tanh temporaries
    return tiles + weight + out + interm


def _pick_batch_tile(B, S, H, itemsize, budget):
    """Largest divisor of B whose per-step footprint fits the VMEM budget,
    while keeping >= 2 grid steps (>= 4 when the tile is still big enough to
    amortize the ~0.35us per-step overhead)."""
    divisors = [d for d in range(1, B + 1) if B % d == 0]
    ok2 = [d for d in divisors if B == 1 or B // d >= 2] or [1]
    fit2 = [d for d in ok2 if _step_bytes(d, S, H, itemsize) <= budget] or [ok2[0]]
    best = fit2[-1]
    fit4 = [d for d in fit2
            if B // d >= 4 and _step_bytes(d, S, H, itemsize) >= (512 << 10)]
    if fit4:
        best = fit4[-1]
    return best


def _vmem_limit_bytes(step_bytes_val, capacity):
    """Always pass an explicit limit (v5e's scoped default is only 16 MiB),
    clamped to the physical capacity (64 MiB on v7x)."""
    need = int(step_bytes_val * 1.25) + (2 << 20)   # headroom for compiler scratch
    return min(max(need, 32 << 20), capacity)


def _gcn_kernel(mask_ref, hid_ref, wT_ref, out_ref):
    # mask_ref: (Bt, S, S)  hid_ref: (Bt, S, H)  wT_ref: (H, H) = W.T
    # out_ref:  (Bt, 1, H)
    Bt, S, _ = mask_ref.shape
    H = hid_ref.shape[-1]

    m = mask_ref[...]                                   # (Bt, S, S) bf16
    h = hid_ref[...]                                    # (Bt, S, H) bf16

    # message passing: batched normed_mask @ hidden on the MXU, f32 accumulate
    mh = jnp.einsum("bij,bjh->bih", m, h,
                    preferred_element_type=jnp.float32)   # (Bt, S, H) f32

    # fc1 (no bias): one fused GEMM across the whole tile; bf16 MXU inputs,
    # f32 accumulation.  The reshape is copy-free (S padded to a sublane
    # multiple, H to a lane multiple).
    x = jnp.dot(mh.reshape(Bt * S, H).astype(wT_ref.dtype), wT_ref[...],
                preferred_element_type=jnp.float32)       # (Bt*S, H) f32
    x = x.reshape(Bt, S, H)

    # nonzero count from the pre-activation (tanh(x)==0 iff x==0): the VPU
    # compare/sum overlaps with the EUP tanh instead of waiting for it.
    nz = jnp.sum((x != 0.0).astype(jnp.float32), axis=1)   # (Bt, H) f32
    y = jnp.tanh(x)                                        # f32, EUP
    s = jnp.sum(y, axis=1)                                 # (Bt, H) f32

    # nz == 0 yields inf/nan, same as the PyTorch module (documented precondition).
    out_ref[:, 0, :] = (s * pl.reciprocal(nz, approx=True)).astype(out_ref.dtype)


def gcn_forward(hidden, mask_matrix, weight, *, batch_tile=None,
                compute_dtype=jnp.bfloat16):
    """hidden: [B, S, H], mask_matrix: [B, S, S], weight: [H, H] (out, in)."""
    B, S, H = hidden.shape
    out_dtype = hidden.dtype

    # Lane/sublane padding (semantics-preserving zero padding, see header).
    Sp = _round_up(S, 8)
    Hp = _round_up(max(H, 128), 128)

    mask_c = mask_matrix.astype(compute_dtype)   # binary adjacency mask: exact in bf16
    hid_c = hidden.astype(compute_dtype)
    wT = weight.T.astype(compute_dtype)          # hoisted one-time transpose

    if Sp != S:
        mask_c = jnp.pad(mask_c, ((0, 0), (0, Sp - S), (0, Sp - S)))
        hid_c = jnp.pad(hid_c, ((0, 0), (0, Sp - S), (0, 0)))
    if Hp != H:
        hid_c = jnp.pad(hid_c, ((0, 0), (0, 0), (0, Hp - H)))
        wT = jnp.pad(wT, ((0, Hp - H), (0, Hp - H)))

    itemsize = jnp.dtype(compute_dtype).itemsize
    capacity = _vmem_capacity_bytes()
    budget = int(capacity * 0.7)                 # headroom: ~45 MiB on v7x, ~90 MiB on v5e/v6e
    Bt = batch_tile if batch_tile is not None else _pick_batch_tile(
        B, Sp, Hp, itemsize, budget)
    assert B % Bt == 0
    grid = (B // Bt,)

    out = pl.pallas_call(
        _gcn_kernel,
        out_shape=jax.ShapeDtypeStruct((B, 1, Hp), out_dtype),
        grid_spec=pltpu.PrefetchScalarGridSpec(
            num_scalar_prefetch=0,
            grid=grid,
            in_specs=[
                pl.BlockSpec((Bt, Sp, Sp), lambda b: (b, 0, 0)),
                pl.BlockSpec((Bt, Sp, Hp), lambda b: (b, 0, 0)),
                pl.BlockSpec((Hp, Hp), lambda b: (0, 0)),   # weight resident across steps
            ],
            out_specs=pl.BlockSpec((Bt, 1, Hp), lambda b: (b, 0, 0)),
        ),
        compiler_params=pltpu.CompilerParams(
            dimension_semantics=("parallel",),
            vmem_limit_bytes=_vmem_limit_bytes(
                _step_bytes(Bt, Sp, Hp, itemsize), capacity),
        ),
    )(mask_c, hid_c, wT)
    return out.reshape(B, Hp)[:, :H]


def reference_forward(hidden, mask_matrix, weight):
    normed_mask = mask_matrix.astype(jnp.float32)
    h = jnp.einsum("bij,bjh->bih", normed_mask, hidden.astype(jnp.float32))
    h = jnp.einsum("bih,oh->bio", h, weight.astype(jnp.float32))
    y = jnp.tanh(h)
    nz = jnp.sum((y != 0.0), axis=1).astype(jnp.float32)
    return jnp.sum(y, axis=1) / nz


if __name__ == "__main__":
    B, S, H = 4, 8, 32
    key = jax.random.PRNGKey(0)
    k_h, k_m, k_w = jax.random.split(key, 3)

    hidden = jax.random.normal(k_h, (B, S, H), dtype=jnp.float32)
    # binary adjacency-style mask (self loops ensure no all-zero rows -> nz > 0)
    mask = (jax.random.uniform(k_m, (B, S, S)) > 0.5).astype(jnp.float32)
    mask = jnp.maximum(mask, jnp.eye(S, dtype=jnp.float32)[None])
    # fc1 weight, nn.Linear(hidden, hidden, bias=False) -> [H, H] (out, in)
    bound = 1.0 / (H ** 0.5)
    weight = jax.random.uniform(k_w, (H, H), minval=-bound, maxval=bound,
                                dtype=jnp.float32)

    out = jax.jit(gcn_forward)(hidden, mask, weight)
    jax.block_until_ready(out)

    ref = reference_forward(hidden, mask, weight)
    assert out.shape == (B, H)
    # bf16 MXU inputs + approx reciprocal -> looser tolerance than pure f32
    assert jnp.allclose(out, ref, atol=2e-2, rtol=2e-2), "mismatch vs reference"

    print("KERNEL_OK")
</pallas_src>

<mosaic_0001>
module attributes {stable_mosaic.version = 11 : i64} {
  func.func @_gcn_kernel(%arg0: i32, %arg1: memref<2x8x8xbf16, #tpu.memory_space<vmem>>, %arg2: memref<2x8x128xbf16, #tpu.memory_space<vmem>>, %arg3: memref<128x128xbf16, #tpu.memory_space<vmem>>, %arg4: memref<2x1x128xf32, #tpu.memory_space<vmem>>) attributes {dimension_semantics = [#tpu.dimension_semantics<parallel>], iteration_bounds = array<i64: 2>, scalar_prefetch = 0 : i64, scratch_operands = 0 : i64, tpu.core_type = #tpu.core_type<tc>, window_params = [{transform_indices = @transform_0, window_bounds = array<i64: 2, 8, 8>}, {transform_indices = @transform_1, window_bounds = array<i64: 2, 8, 128>}, {pipeline_mode = #tpu.pipeline_mode<synchronous>, transform_indices = @transform_2, window_bounds = array<i64: 128, 128>}, {transform_indices = @transform_3, window_bounds = array<i64: 2, 1, 128>}]} {
    %c0 = arith.constant 0 : index
    %c0_0 = arith.constant 0 : index
    %c0_1 = arith.constant 0 : index
    %0 = vector.load %arg1[%c0, %c0_0, %c0_1] : memref<2x8x8xbf16, #tpu.memory_space<vmem>>, vector<2x8x8xbf16>
    %c0_2 = arith.constant 0 : index
    %c0_3 = arith.constant 0 : index
    %c0_4 = arith.constant 0 : index
    %1 = vector.load %arg2[%c0_2, %c0_3, %c0_4] : memref<2x8x128xbf16, #tpu.memory_space<vmem>>, vector<2x8x128xbf16>
    "tpu.trace_start"() <{level = 10 : i32, message = "bij,bjh->bih"}> : () -> ()
    %cst = arith.constant dense<0.000000e+00> : vector<2x8x128xf32>
    %2 = tpu.matmul %0, %1, %cst {dimension_numbers = #tpu.dot_dimension_numbers<[2], [1], [1], [2], [0, 0, 0, 1, 1, 2], [0], [0]>} : vector<2x8x8xbf16>, vector<2x8x128xbf16>, vector<2x8x128xf32> -> vector<2x8x128xf32>
    "tpu.trace_stop"() : () -> ()
    %3 = vector.shape_cast %2 : vector<2x8x128xf32> to vector<16x128xf32>
    %4 = arith.truncf %3 : vector<16x128xf32> to vector<16x128xbf16>
    %c0_5 = arith.constant 0 : index
    %c0_6 = arith.constant 0 : index
    %5 = vector.load %arg3[%c0_5, %c0_6] : memref<128x128xbf16, #tpu.memory_space<vmem>>, vector<128x128xbf16>
    %cst_7 = arith.constant dense<0.000000e+00> : vector<16x128xf32>
    %6 = tpu.matmul %4, %5, %cst_7 {dimension_numbers = #tpu.dot_dimension_numbers<[1], [0], [0], [1], [0, 0, 1, 1], [], []>} : vector<16x128xbf16>, vector<128x128xbf16>, vector<16x128xf32> -> vector<16x128xf32>
    %7 = vector.shape_cast %6 : vector<16x128xf32> to vector<2x8x128xf32>
    %cst_8 = arith.constant 0.000000e+00 : f32
    %8 = vector.broadcast %cst_8 : f32 to vector<2x8x128xf32>
    %9 = arith.cmpf one, %7, %8 : vector<2x8x128xf32>
    %10 = arith.extui %9 : vector<2x8x128xi1> to vector<2x8x128xi32>
    %11 = arith.sitofp %10 : vector<2x8x128xi32> to vector<2x8x128xf32>
    %cst_9 = arith.constant dense<0.000000e+00> : vector<2x128xf32>
    %12 = vector.multi_reduction <add>, %11, %cst_9 [1] : vector<2x8x128xf32> to vector<2x128xf32>
    %13 = math.tanh %7 : vector<2x8x128xf32>
    %cst_10 = arith.constant dense<0.000000e+00> : vector<2x128xf32>
    %14 = vector.multi_reduction <add>, %13, %cst_10 [1] : vector<2x8x128xf32> to vector<2x128xf32>
    %15 = tpu.reciprocal %12 {approx = true} : vector<2x128xf32> -> vector<2x128xf32>
    %16 = arith.mulf %14, %15 : vector<2x128xf32>
    %c0_11 = arith.constant 0 : index
    %c0_12 = arith.constant 0 : index
    %c0_13 = arith.constant 0 : index
    %17 = vector.load %arg4[%c0_11, %c0_12, %c0_13] : memref<2x1x128xf32, #tpu.memory_space<vmem>>, vector<2x1x128xf32>
    %18 = vector.shape_cast %17 : vector<2x1x128xf32> to vector<2x128xf32>
    %19 = vector.shape_cast %16 : vector<2x128xf32> to vector<2x1x128xf32>
    tpu.vector_store %arg4[%c0_11, %c0_12, %c0_13], %19 {strides = array<i32>} : memref<2x1x128xf32, #tpu.memory_space<vmem>>, vector<2x1x128xf32>,
    return
  }
  func.func @transform_0(%arg0: i32) -> (i32, i32, i32) {
    %c0_i32 = arith.constant 0 : i32
    %c0_i32_0 = arith.constant 0 : i32
    %c0_i32_1 = arith.constant 0 : i32
    return %arg0, %c0_i32, %c0_i32_0 : i32, i32, i32
  }
  func.func @transform_1(%arg0: i32) -> (i32, i32, i32) {
    %c0_i32 = arith.constant 0 : i32
    %c0_i32_0 = arith.constant 0 : i32
    %c0_i32_1 = arith.constant 0 : i32
    return %arg0, %c0_i32, %c0_i32_0 : i32, i32, i32
  }
  func.func @transform_2(%arg0: i32) -> (i32, i32) {
    %c0_i32 = arith.constant 0 : i32
    %c0_i32_0 = arith.constant 0 : i32
    %c0_i32_1 = arith.constant 0 : i32
    return %c0_i32, %c0_i32_0 : i32, i32
  }
  func.func @transform_3(%arg0: i32) -> (i32, i32, i32) {
    %c0_i32 = arith.constant 0 : i32
    %c0_i32_0 = arith.constant 0 : i32
    %c0_i32_1 = arith.constant 0 : i32
    return %arg0, %c0_i32, %c0_i32_0 : i32, i32, i32
  }
}

</mosaic_0001>

<llo_original>
// kernel: gcn_forward.1
$region0: #{gcn_forward.1}
  #allocation0 [shape = 'u32[]', space=smem, size = 0x4, offset = 0x4, fixed_abs, tag = 'smem constant byte address 0x4 - core index']
  #allocation1 [shape = 'u32[144,128]{1,0:T(1,128)}', space=vmem, size = 0x12000, scoped, tag = 'internal scratch']
  %s0 = inlined_call_operand.vmem [shape: bf16[4,8,8], index: 0, kind: input, shape index: {}]
  %s1 = inlined_call_operand.vmem [shape: bf16[4,8,128], index: 1, kind: input, shape index: {}]
  %s2 = inlined_call_operand.vmem [shape: bf16[128,128], index: 2, kind: input, shape index: {}]
  %s3 = inlined_call_operand.hbm [shape: f32[4,1,128], index: 3, kind: output, shape index: {}]
  %s4 = sld [smem:[#allocation0]]
  $region45: #{gcn_forward.1} parent=0
    _
  %s6 = ssub.s32 1, %s4
  %s7 = scalar_select 0, %s6, %s4
  $region1: #{gcn_forward.1} parent=0
    #allocation2 [shape = 'u8[2048]{0}', space=vmem, size = 0x800, scoped, tag = 'output window, operand 0']
    #allocation3 [shape = 's32[2]{0}', space=sflag, size = 0x8, scoped, tag = 'scoped memory for gcn_forward.1']
    %8 = vsyncpa [#allocation3], 0
    %s9 = scalar_lea.sflag [#allocation3], 1
    %10 = vsyncpa %s9, 0
    loop: start=0, step=1, limit=4
    $region2: #{gcn_forward.1} parent=1 // loop_pre_header
      _
    $region3: #{gcn_forward.1} parent=1 // loop_header
      %s12 = sphi 0, %s16
      %p13 = scmp.ge.s32.totalorder %s12, 4
      %s22 = sphi 0, %s24
      %s25 = sphi 0, %s22
      %s26 = sphi 0, %s25
      %s42 = sphi 0, %s26
      %s48 = sphi 0, %s50
      %s51 = sphi 0, %s48
      %s52 = sphi 0, %s51
      %s68 = sphi 0, %s52
      %s72 = sphi 0, %s72
      %s74 = sphi 0, %s72
      %s75 = sphi 0, %s74
      %s89 = sphi 0, %s75
      %s95 = sphi 0, %s97
      %s98 = sphi 0, %s95
      %s99 = sphi 0, %s98
      %s115 = sphi 0, %s99
    $region4: #{gcn_forward.1} parent=1 // loop_header_branch
      %15 = sbr.rel (%p13) target = $region8
    $region5: #{gcn_forward.1} parent=1 // loop_body
      %s17 = ssub.s32 %s12, 1
      %s18 = ssub.s32 %s12, 2
      %s19 = sadd.s32 %s12, 1
      %s20 = ssub.s32 %s12, %s19
      %p21 = scmp.eq.s32.totalorder %s20, 0
      %s23 = sadd.s32 %s22, 1
      %s24 = scalar_select %p21, %s22, %s23
      %p27 = pneg %p21
      %p28 = scmp.eq.s32.totalorder %s12, 1
      %p29 = por %p27, %p28
      %p30 = scmp.ne.s32.totalorder %s22, %s25
      %p31 = scmp.eq.s32.totalorder %s12, 0
      %p32 = por %p30, %p31
      %p33 = scmp.ne.s32.totalorder %s22, %s25
      %p34 = scmp.eq.s32.totalorder %s17, 1
      %p35 = por %p33, %p34
      %p36 = scmp.ne.s32.totalorder %s25, %s26
      %p37 = scmp.eq.s32.totalorder %s17, 0
      %p38 = por %p36, %p37
      %p39 = scmp.ne.s32.totalorder %s25, %s26
      %p40 = scmp.eq.s32.totalorder %s18, 1
      %p41 = por %p39, %p40
      %p43 = scmp.ne.s32.totalorder %s26, %s42
      %p44 = scmp.eq.s32.totalorder %s18, 0
      %p45 = por %p43, %p44
      %s46 = ssub.s32 %s12, %s19
      %p47 = scmp.eq.s32.totalorder %s46, 0
      %s49 = sadd.s32 %s48, 1
      %s50 = scalar_select %p47, %s48, %s49
      %p53 = pneg %p47
      %p54 = scmp.eq.s32.totalorder %s12, 1
      %p55 = por %p53, %p54
      %p56 = scmp.ne.s32.totalorder %s48, %s51
      %p57 = scmp.eq.s32.totalorder %s12, 0
      %p58 = por %p56, %p57
      %p59 = scmp.ne.s32.totalorder %s48, %s51
      %p60 = scmp.eq.s32.totalorder %s17, 1
      %p61 = por %p59, %p60
      %p62 = scmp.ne.s32.totalorder %s51, %s52
      %p63 = scmp.eq.s32.totalorder %s17, 0
      %p64 = por %p62, %p63
      %p65 = scmp.ne.s32.totalorder %s51, %s52
      %p66 = scmp.eq.s32.totalorder %s18, 1
      %p67 = por %p65, %p66
      %p69 = scmp.ne.s32.totalorder %s52, %s68
      %p70 = scmp.eq.s32.totalorder %s18, 0
      %p71 = por %p69, %p70
      %s73 = sadd.s32 %s72, 1
      %p76 = scmp.eq.s32.totalorder %s12, 1
      %p77 = scmp.ne.s32.totalorder %s72, %s74
      %p78 = scmp.eq.s32.totalorder %s12, 0
      %p79 = por %p77, %p78
      %p80 = scmp.ne.s32.totalorder %s72, %s74
      %p81 = scmp.eq.s32.totalorder %s17, 1
      %p82 = por %p80, %p81
      %p83 = scmp.ne.s32.totalorder %s74, %s75
      %p84 = scmp.eq.s32.totalorder %s17, 0
      %p85 = por %p83, %p84
      %p86 = scmp.ne.s32.totalorder %s74, %s75
      %p87 = scmp.eq.s32.totalorder %s18, 1
      %p88 = por %p86, %p87
      %p90 = scmp.ne.s32.totalorder %s75, %s89
      %p91 = scmp.eq.s32.totalorder %s18, 0
      %p92 = por %p90, %p91
      %s93 = ssub.s32 %s12, %s19
      %p94 = scmp.eq.s32.totalorder %s93, 0
      %s96 = sadd.s32 %s95, 1
      %s97 = scalar_select %p94, %s95, %s96
      %p100 = pneg %p94
      %p101 = scmp.eq.s32.totalorder %s12, 1
      %p102 = por %p100, %p101
      %p103 = scmp.ne.s32.totalorder %s95, %s98
      %p104 = scmp.eq.s32.totalorder %s12, 0
      %p105 = por %p103, %p104
      %p106 = scmp.ne.s32.totalorder %s95, %s98
      %p107 = scmp.eq.s32.totalorder %s17, 1
      %p108 = por %p106, %p107
      %p109 = scmp.ne.s32.totalorder %s98, %s99
      %p110 = scmp.eq.s32.totalorder %s17, 0
      %p111 = por %p109, %p110
      %p112 = scmp.ne.s32.totalorder %s98, %s99
      %p113 = scmp.eq.s32.totalorder %s18, 1
      %p114 = por %p112, %p113
      %p116 = scmp.ne.s32.totalorder %s99, %s115
      %p117 = scmp.eq.s32.totalorder %s18, 0
      %p118 = por %p116, %p117
      %p119 = scmp.le.s32.totalorder 1, %s12
      %p120 = scmp.lt.s32.totalorder %s12, 3
      %p121 = pnand %p119, %p120
      %p122 = pneg %p121
      // Predicated region
      $region9: #{gcn_forward.1} parent=5 // pred_check
        _
      $region10: #{gcn_forward.1} parent=5 // pred_check_branch
        %124 = sbr.rel (%p121) target = $region12
      $region11: #{gcn_forward.1} parent=5 // pred_region
        %s125 = ssub.s32 %s12, 1
        // Predicated region
        $region13: #{gcn_forward.1} parent=11 // pred_check
          %p126 = pneg %p85
        $region14: #{gcn_forward.1} parent=11 // pred_check_branch
          %128 = sbr.rel (%p126) target = $region16
        $region15: #{gcn_forward.1} parent=11 // pred_region
          _
        $region16: #{gcn_forward.1} parent=11 // pred_fallthru
          _
      $region12: #{gcn_forward.1} parent=5 // pred_fallthru
        _
      %p129 = scmp.lt.s32.totalorder %s12, 2
      // Predicated region
      $region17: #{gcn_forward.1} parent=5 // pred_check
        %p130 = pneg %p129
      $region18: #{gcn_forward.1} parent=5 // pred_check_branch
        %132 = sbr.rel (%p130) target = $region20
      $region19: #{gcn_forward.1} parent=5 // pred_region
        // Predicated region
        $region21: #{gcn_forward.1} parent=19 // pred_check
          %p133 = pneg %p32
        $region22: #{gcn_forward.1} parent=19 // pred_check_branch
          %135 = sbr.rel (%p133) target = $region24
        $region23: #{gcn_forward.1} parent=19 // pred_region
          %s136 = smul.u32 2, %s12
          %p137 = scmp.lt.s32.totalorder %s136, 3
          %s138 = scalar_select %p137, %s136, 3
          %s139 = smul.addr %s138, 4
          %s140 = scalar_lea.vmem %s0, %s139
          %s141 = smul.u32 2, %s12
        $region24: #{gcn_forward.1} parent=19 // pred_fallthru
          _
        // Predicated region
        $region25: #{gcn_forward.1} parent=19 // pred_check
          %p142 = pneg %p58
        $region26: #{gcn_forward.1} parent=19 // pred_check_branch
          %144 = sbr.rel (%p142) target = $region28
        $region27: #{gcn_forward.1} parent=19 // pred_region
          %s145 = smul.u32 2, %s12
          %p146 = scmp.lt.s32.totalorder %s145, 3
          %s147 = scalar_select %p146, %s145, 3
          %s148 = smul.addr %s147, 4
          %s149 = scalar_lea.vmem %s1, %s148
          %s150 = smul.u32 2, %s12
        $region28: #{gcn_forward.1} parent=19 // pred_fallthru
          _
      $region20: #{gcn_forward.1} parent=5 // pred_fallthru
        _
      %p151 = scmp.le.s32.totalorder 1, %s12
      %p152 = scmp.lt.s32.totalorder %s12, 3
      %p153 = pnand %p151, %p152
      %p154 = pneg %p153
      // Predicated region
      $region29: #{gcn_forward.1} parent=5 // pred_check
        _
      $region30: #{gcn_forward.1} parent=5 // pred_check_branch
        %156 = sbr.rel (%p153) target = $region32
      $region31: #{gcn_forward.1} parent=5 // pred_region
        %s157 = ssub.s32 %s12, 1
        %s158 = smul.u32 2, %s17
        %p159 = scmp.lt.s32.totalorder %s158, 3
        %s160 = scalar_select %p159, %s158, 3
        %s161 = smul.addr %s160, 4
        %s162 = scalar_lea.vmem %s0, %s161
        %p163 = pneg %p38
        %p164 = pneg %p35
        %s165 = smul.u32 2, %s17
        %p166 = scmp.lt.s32.totalorder %s165, 3
        %s167 = scalar_select %p166, %s165, 3
        %s168 = smul.addr %s167, 4
        %s169 = scalar_lea.vmem %s1, %s168
        %p170 = pneg %p64
        %p171 = pneg %p61
        %p172 = pneg %p85
        %p173 = pneg %p82
        %p174 = pneg %p111
        %p175 = pneg %p108
        %s176 = sand.u32 %s98, 1
        %s177 = scalar_lea.sflag [#allocation3], %s176
        %s178 = sand.u32 %s98, 1
        %s179 = smul.addr %s178, 2
        %s180 = scalar_lea.vmem [#allocation2], %s179
        %s181 = smul.u32 2, %s17
        %p182 = scmp.lt.s32.totalorder %s181, 3
        %s183 = scalar_select %p182, %s181, 3
        %s184 = smul.addr %s183, 4
        %s185 = scalar_lea.vmem %s0, %s184
        %s186 = smul.u32 2, %s17
        %s187 = smul.u32 2, %s17
        %p188 = scmp.lt.s32.totalorder %s187, 3
        %s189 = scalar_select %p188, %s187, 3
        %s190 = smul.addr %s189, 4
        %s191 = scalar_lea.vmem %s1, %s190
        %s192 = smul.u32 2, %s17
        %s193 = smul.u32 2, %s17
        %v195 = vld [vmem:[%s185] sm:$0xf]
        %v196 = vld [vmem:[%s185 + $0x4] sm:$0xf]
        %v197 = vld [vmem:[%s191] sm:$0xf]
        %v198 = vld [vmem:[%s191 + $0x4] sm:$0xf]
        %vm199 = vcmask 64512
        %v201 = vsel %vm199, %v195, 0
        %vm203 = vcmask 1043456
        %v205 = vsel %vm203, %v197, 0
        %207 = vmatprep.subr.bf16.mxu0 0
        %208 = vmatpush1.bf16.msra.mxu0 %v205
        %209 = vmatprep.subr.bf16.mxu0 0
        %210 = vmatpush1.bf16.msra.mxu0 0
        %211 = vmatprep.subr.bf16.mxu0 0
        %212 = vmatpush1.bf16.msra.mxu0 0
        %213 = vmatprep.subr.bf16.mxu0 0
        %214 = vmatpush1.bf16.msra.mxu0 0
        %215 = vmatprep.subr.bf16.mxu0 0
        %216 = vmatpush1.bf16.msra.mxu0 0
        %217 = vmatprep.subr.bf16.mxu0 0
        %218 = vmatpush1.bf16.msra.mxu0 0
        %219 = vmatprep.subr.bf16.mxu0 0
        %220 = vmatpush1.bf16.msra.mxu0 0
        %221 = vmatprep.subr.bf16.mxu0 0
        %222 = vmatpush1.bf16.msra.mxu0 0
        %223 = vmatprep.subr.bf16.mxu0 0
        %224 = vmatpush1.bf16.msra.mxu0 0
        %225 = vmatprep.subr.bf16.mxu0 0
        %226 = vmatpush1.bf16.msra.mxu0 0
        %227 = vmatprep.subr.bf16.mxu0 0
        %228 = vmatpush1.bf16.msra.mxu0 0
        %229 = vmatprep.subr.bf16.mxu0 0
        %230 = vmatpush1.bf16.msra.mxu0 0
        %231 = vmatprep.subr.bf16.mxu0 0
        %232 = vmatpush1.bf16.msra.mxu0 0
        %233 = vmatprep.subr.bf16.mxu0 0
        %234 = vmatpush1.bf16.msra.mxu0 0
        %235 = vmatprep.subr.bf16.mxu0 0
        %236 = vmatpush1.bf16.msra.mxu0 0
        %237 = vmatprep.subr.bf16.mxu0 0
        %238 = vmatpush1.bf16.msra.mxu0 0
        %239 = vmatprep.mubr.bf16.mxu0 0
        %240 = vmatmul.mubr.bf16.gmra.mrb[0].mxu0 %v201
        %v241 = vpop.f32.mrb[0].mxu0
        %v242 = vadd.f32 0.0, %v241
        %v243 = vpop.f32.mrb[0].mxu0
        %v244 = vpop.f32.mrb[0].mxu0
        %v245 = vpop.f32.mrb[0].mxu0
        %246 = vdwg.mxu0
        %v248 = vsel %vm199, %v196, 0
        %v251 = vsel %vm203, %v198, 0
        %253 = vmatprep.subr.bf16.mxu0 0
        %254 = vmatpush1.bf16.msra.mxu0 %v251
        %255 = vmatprep.subr.bf16.mxu0 0
        %256 = vmatpush1.bf16.msra.mxu0 0
        %257 = vmatprep.subr.bf16.mxu0 0
        %258 = vmatpush1.bf16.msra.mxu0 0
        %259 = vmatprep.subr.bf16.mxu0 0
        %260 = vmatpush1.bf16.msra.mxu0 0
        %261 = vmatprep.subr.bf16.mxu0 0
        %262 = vmatpush1.bf16.msra.mxu0 0
        %263 = vmatprep.subr.bf16.mxu0 0
        %264 = vmatpush1.bf16.msra.mxu0 0
        %265 = vmatprep.subr.bf16.mxu0 0
        %266 = vmatpush1.bf16.msra.mxu0 0
        %267 = vmatprep.subr.bf16.mxu0 0
        %268 = vmatpush1.bf16.msra.mxu0 0
        %269 = vmatprep.subr.bf16.mxu0 0
        %270 = vmatpush1.bf16.msra.mxu0 0
        %271 = vmatprep.subr.bf16.mxu0 0
        %272 = vmatpush1.bf16.msra.mxu0 0
        %273 = vmatprep.subr.bf16.mxu0 0
        %274 = vmatpush1.bf16.msra.mxu0 0
        %275 = vmatprep.subr.bf16.mxu0 0
        %276 = vmatpush1.bf16.msra.mxu0 0
        %277 = vmatprep.subr.bf16.mxu0 0
        %278 = vmatpush1.bf16.msra.mxu0 0
        %279 = vmatprep.subr.bf16.mxu0 0
        %280 = vmatpush1.bf16.msra.mxu0 0
        %281 = vmatprep.subr.bf16.mxu0 0
        %282 = vmatpush1.bf16.msra.mxu0 0
        %283 = vmatprep.subr.bf16.mxu0 0
        %284 = vmatpush1.bf16.msra.mxu0 0
        %285 = vmatprep.mubr.bf16.mxu0 0
        %286 = vmatmul.mubr.bf16.gmra.mrb[0].mxu0 %v248
        %v287 = vpop.f32.mrb[0].mxu0
        %v288 = vadd.f32 0.0, %v287
        %v289 = vpop.f32.mrb[0].mxu0
        %v290 = vpop.f32.mrb[0].mxu0
        %v291 = vpop.f32.mrb[0].mxu0
        %292 = vdwg.mxu0
        %v293 = vpack.c.bf16 %v288, %v242
        %v294 = vld [vmem:[%s2] sm:$0xf]
        %v295 = vld [vmem:[%s2 + $0x4] sm:$0xf]
        %v296 = vld [vmem:[%s2 + $0x8] sm:$0xf]
        %v297 = vld [vmem:[%s2 + $0xc] sm:$0xf]
        %v298 = vld [vmem:[%s2 + $0x10] sm:$0xf]
        %v299 = vld [vmem:[%s2 + $0x14] sm:$0xf]
        %v300 = vld [vmem:[%s2 + $0x18] sm:$0xf]
        %v301 = vld [vmem:[%s2 + $0x1c] sm:$0xf]
        %v302 = vld [vmem:[%s2 + $0x20] sm:$0xf]
        %v303 = vld [vmem:[%s2 + $0x24] sm:$0xf]
        %v304 = vld [vmem:[%s2 + $0x28] sm:$0xf]
        %v305 = vld [vmem:[%s2 + $0x2c] sm:$0xf]
        %v306 = vld [vmem:[%s2 + $0x30] sm:$0xf]
        %v307 = vld [vmem:[%s2 + $0x34] sm:$0xf]
        %v308 = vld [vmem:[%s2 + $0x38] sm:$0xf]
        %v309 = vld [vmem:[%s2 + $0x3c] sm:$0xf]
        %v326 = vunpack.c.l.b16 %v294
        %v327 = vunpack.c.l.b16 %v295
        %v328 = vunpack.c.l.b16 %v296
        %v329 = vunpack.c.l.b16 %v297
        %v330 = vunpack.c.l.b16 %v298
        %v331 = vunpack.c.l.b16 %v299
        %v332 = vunpack.c.l.b16 %v300
        %v333 = vunpack.c.l.b16 %v301
        %v334 = vunpack.c.l.b16 %v302
        %v335 = vunpack.c.l.b16 %v303
        %v336 = vunpack.c.l.b16 %v304
        %v337 = vunpack.c.l.b16 %v305
        %v338 = vunpack.c.l.b16 %v306
        %v339 = vunpack.c.l.b16 %v307
        %v340 = vunpack.c.l.b16 %v308
        %v341 = vunpack.c.l.b16 %v309
        %v342 = vpack.c.b16 %v327, %v326
        %v343 = vpack.c.b16 %v329, %v328
        %v344 = vpack.c.b16 %v331, %v330
        %v345 = vpack.c.b16 %v333, %v332
        %v346 = vpack.c.b16 %v335, %v334
        %v347 = vpack.c.b16 %v337, %v336
        %v348 = vpack.c.b16 %v339, %v338
        %v349 = vpack.c.b16 %v341, %v340
        %358 = vmatprep.subr.bf16.mxu0 0
        %359 = vmatpush1.bf16.msra.mxu0 %v342
        %360 = vmatprep.subr.bf16.mxu0 0
        %361 = vmatpush1.bf16.msra.mxu0 %v343
        %362 = vmatprep.subr.bf16.mxu0 0
        %363 = vmatpush1.bf16.msra.mxu0 %v344
        %364 = vmatprep.subr.bf16.mxu0 0
        %365 = vmatpush1.bf16.msra.mxu0 %v345
        %366 = vmatprep.subr.bf16.mxu0 0
        %367 = vmatpush1.bf16.msra.mxu0 %v346
        %368 = vmatprep.subr.bf16.mxu0 0
        %369 = vmatpush1.bf16.msra.mxu0 %v347
        %370 = vmatprep.subr.bf16.mxu0 0
        %371 = vmatpush1.bf16.msra.mxu0 %v348
        %372 = vmatprep.subr.bf16.mxu0 0
        %373 = vmatpush1.bf16.msra.mxu0 %v349
        %374 = vmatprep.subr.bf16.mxu0 0
        %375 = vmatpush1.bf16.msra.mxu0 0
        %376 = vmatprep.subr.bf16.mxu0 0
        %377 = vmatpush1.bf16.msra.mxu0 0
        %378 = vmatprep.subr.bf16.mxu0 0
        %379 = vmatpush1.bf16.msra.mxu0 0
        %380 = vmatprep.subr.bf16.mxu0 0
        %381 = vmatpush1.bf16.msra.mxu0 0
        %382 = vmatprep.subr.bf16.mxu0 0
        %383 = vmatpush1.bf16.msra.mxu0 0
        %384 = vmatprep.subr.bf16.mxu0 0
        %385 = vmatpush1.bf16.msra.mxu0 0
        %386 = vmatprep.subr.bf16.mxu0 0
        %387 = vmatpush1.bf16.msra.mxu0 0
        %388 = vmatprep.subr.bf16.mxu0 0
        %389 = vmatpush1.bf16.msra.mxu0 0
        %390 = vmatprep.mubr.bf16.mxu0 0
        %391 = vmatmul.mubr.bf16.gmra.mrb[0].mxu0 %v293
        %v392 = vpop.f32.mrb[0].mxu0
        %v393 = vadd.f32 0.0, %v392
        %v394 = vpop.f32.mrb[0].mxu0
        %v395 = vpop.f32.mrb[0].mxu0
        %v396 = vadd.f32 0.0, %v395
        %v397 = vpop.f32.mrb[0].mxu0
        %398 = vdwg.mxu0
        %vm399 = vcmp.ne.f32.partialorder %v393, 0.0
        %vm400 = vcmp.ne.f32.partialorder %v396, 0.0
        %v401 = vsel %vm399, 1, 0
        %v402 = vsel %vm400, 1, 0
        %v403 = vcvt.s32.f32 %v401
        %v404 = vcvt.s32.f32 %v402
        %v405 = vrot.slane %v403, 4
        %v406 = vadd.f32 %v403, %v405
        %v407 = vrot.slane %v406, 2
        %v408 = vadd.f32 %v406, %v407
        %v409 = vrot.slane %v408, 1
        %v410 = vadd.f32 %v408, %v409
        %v411 = vrot.slane %v404, 4
        %v412 = vadd.f32 %v404, %v411
        %v413 = vrot.slane %v412, 2
        %v414 = vadd.f32 %v412, %v413
        %v415 = vrot.slane %v414, 1
        %v416 = vadd.f32 %v414, %v415
        %v417 = vtanh.pop %v393
        %v418 = vtanh.pop %v396
        %v419 = vrot.slane %v417, 4
        %v420 = vadd.f32 %v417, %v419
        %v421 = vrot.slane %v420, 2
        %v422 = vadd.f32 %v420, %v421
        %v423 = vrot.slane %v422, 1
        %v424 = vadd.f32 %v422, %v423
        %v425 = vrot.slane %v418, 4
        %v426 = vadd.f32 %v418, %v425
        %v427 = vrot.slane %v426, 2
        %v428 = vadd.f32 %v426, %v427
        %v429 = vrot.slane %v428, 1
        %v430 = vadd.f32 %v428, %v429
        %v431 = vrcp.pop %v410
        %v432 = vrcp.pop %v416
        %v433 = vmul.f32 %v424, %v431
        %v434 = vmul.f32 %v430, %v432
        %435 = vst [vmem:[%s180] sm:$0x1] %v433
        %436 = vst [vmem:[%s180 + $0x1] sm:$0x1] %v434
        %s437 = sand.u32 %s98, 1
        %s438 = scalar_lea.sflag [#allocation3], %s437
        %s439 = sand.u32 %s98, 1
        %s440 = smul.addr %s439, 2
        %s441 = scalar_lea.vmem [#allocation2], %s440
        // Predicated region
        $region33: #{gcn_forward.1} parent=31 // pred_check
          %p442 = pneg %p108
        $region34: #{gcn_forward.1} parent=31 // pred_check_branch
          %444 = sbr.rel (%p442) target = $region36
        $region35: #{gcn_forward.1} parent=31 // pred_region
          %s445 = smul.u32 2, %s17
          %s447 = ssub.s32 32, 32
          %448 = vsyncadd %s438, %s447
          %s449 = smul.addr %s445, 16
          %s450 = scalar_lea.hbm %s3, %s449
          %s451 = sshll.u32 %s441, 4
          %s452 = int_to_ptr.vmem [resolvable:$true] %s451
          %457 = dma.vmem_to_hbm [thread:$0]  %s452, 32, %s450, %s438, 16, 16, 1
        $region36: #{gcn_forward.1} parent=31 // pred_fallthru
          _
      $region32: #{gcn_forward.1} parent=5 // pred_fallthru
        _
      %p458 = scmp.le.s32.totalorder 2, %s12
      // Predicated region
      $region37: #{gcn_forward.1} parent=5 // pred_check
        %p459 = pneg %p458
      $region38: #{gcn_forward.1} parent=5 // pred_check_branch
        %461 = sbr.rel (%p459) target = $region40
      $region39: #{gcn_forward.1} parent=5 // pred_region
        %s462 = ssub.s32 %s12, 2
        // Predicated region
        $region41: #{gcn_forward.1} parent=39 // pred_check
          %p463 = pneg %p114
        $region42: #{gcn_forward.1} parent=39 // pred_check_branch
          %465 = sbr.rel (%p463) target = $region44
        $region43: #{gcn_forward.1} parent=39 // pred_region
          %s466 = sand.u32 %s99, 1
          %s467 = scalar_lea.sflag [#allocation3], %s466
          %s468 = sand.u32 %s99, 1
          %s469 = smul.addr %s468, 2
          %s470 = scalar_lea.vmem [#allocation2], %s469
          %471 = dma.done %s467, 32
        $region44: #{gcn_forward.1} parent=39 // pred_fallthru
          _
      $region40: #{gcn_forward.1} parent=5 // pred_fallthru
        _
    $region6: #{gcn_forward.1} parent=1 // loop_footer
      %s16 = sadd.s32 1, %s12
    $region7: #{gcn_forward.1} parent=1 // loop_footer_branch
      %11 = sbr.rel target = $region3
    $region8: #{gcn_forward.1} parent=1 // loop_exit
      _
    %472 = vsyncpa [#allocation3], 1
    %s473 = scalar_lea.sflag [#allocation3], 1
    %474 = vsyncpa %s473, 1

</llo_original>
